<compile_context>
chip_gen: v6e
topology: v6e:2x2x1
jax: 0.10.0
libtpu: 0.0.40
codegen_flags: <defaults>
</compile_context>

<pallas_src>
import jax
import jax.numpy as jnp
from jax.experimental import pallas as pl
from jax.experimental.pallas import tpu as pltpu

HIDDEN = 128
LANE = 128


def _round_up(n, m):
    return ((n + m - 1) // m) * m


def _mlp_kernel(x_ref,
                w1_ref, b1_ref,
                w2_ref, b2_ref,
                w3_ref, b3_ref,
                w4_ref, b4_ref,
                o_ref):
    # Layer 1: (tb, S) @ (S, 128) + (1, 128) -> ReLU
    h = jnp.dot(x_ref[...], w1_ref[...], preferred_element_type=jnp.float32)
    h = jnp.maximum(h + b1_ref[...], 0.0)
    # Layer 2: (tb, 128) @ (128, 128) + (1, 128) -> ReLU
    h = jnp.dot(h, w2_ref[...], preferred_element_type=jnp.float32)
    h = jnp.maximum(h + b2_ref[...], 0.0)
    # Layer 3: (tb, 128) @ (128, 128) + (1, 128) -> ReLU
    h = jnp.dot(h, w3_ref[...], preferred_element_type=jnp.float32)
    h = jnp.maximum(h + b3_ref[...], 0.0)
    # Output layer: (tb, 128) @ (128, N_pad) + (1, N_pad)  (lane-dense store)
    out = jnp.dot(h, w4_ref[...], preferred_element_type=jnp.float32) + b4_ref[...]
    o_ref[...] = out.astype(o_ref.dtype)


def flappy_bird_mlp_forward(x, params, *, max_tile_b=256):
    """x: (B, state_dim) float32. params: dict of transposed weights / biases.

    Returns logits of shape (B, n_actions).
    """
    x = x.reshape(x.shape[0], -1)          # equivalent of x.view(x.size(0), -1)
    B, S = x.shape
    w1, b1 = params["w1"], params["b1"]
    w2, b2 = params["w2"], params["b2"]
    w3, b3 = params["w3"], params["b3"]
    w4, b4 = params["w4"], params["b4"]
    n_actions = w4.shape[1]

    # ---- lane-dense output: zero-pad final layer to a multiple of 128 lanes ----
    n_pad = max(LANE, _round_up(n_actions, LANE))
    w4p = jnp.zeros((HIDDEN, n_pad), jnp.float32).at[:, :n_actions].set(w4)
    b4p = jnp.zeros((1, n_pad), jnp.float32).at[:, :n_actions].set(b4)

    # ---- batch tiling: tile of up to max_tile_b rows (multiple of 8 sublanes) ----
    tile_b = min(max_tile_b, _round_up(B, 8))
    b_pad = _round_up(B, tile_b)
    if b_pad != B:
        x = jnp.pad(x, ((0, b_pad - B), (0, 0)))
    grid = (b_pad // tile_b,)

    # Tiled specs for x / out; weights & biases stay resident (constant index_map).
    x_spec = pl.BlockSpec((tile_b, S), lambda i: (i, 0))
    out_spec = pl.BlockSpec((tile_b, n_pad), lambda i: (i, 0))

    def const_spec(shape):
        return pl.BlockSpec(shape, lambda i: tuple(0 for _ in shape))

    out = pl.pallas_call(
        _mlp_kernel,
        out_shape=jax.ShapeDtypeStruct((b_pad, n_pad), jnp.float32),
        grid=grid,
        in_specs=[
            x_spec,
            const_spec(w1.shape), const_spec(b1.shape),
            const_spec(w2.shape), const_spec(b2.shape),
            const_spec(w3.shape), const_spec(b3.shape),
            const_spec(w4p.shape), const_spec(b4p.shape),
        ],
        out_specs=out_spec,
        compiler_params=pltpu.CompilerParams(
            dimension_semantics=("parallel",),
        ),
    )(x, w1, b1, w2, b2, w3, b3, w4p, b4p)

    return out[:B, :n_actions]


def init_params(key, state_dim, n_actions):
    """Deterministic init mimicking nn.Linear's U(-1/sqrt(fan_in), 1/sqrt(fan_in)).
    Weights are stored TRANSPOSED: (in_features, out_features)."""
    dims = [(state_dim, HIDDEN), (HIDDEN, HIDDEN), (HIDDEN, HIDDEN), (HIDDEN, n_actions)]
    params = {}
    keys = jax.random.split(key, 2 * len(dims))
    for i, (fin, fout) in enumerate(dims):
        bound = 1.0 / jnp.sqrt(jnp.float32(fin))
        w = jax.random.uniform(keys[2 * i], (fin, fout), jnp.float32, -bound, bound)
        b = jax.random.uniform(keys[2 * i + 1], (1, fout), jnp.float32, -bound, bound)
        params[f"w{i+1}"] = w
        params[f"b{i+1}"] = b
    return params


def reference_forward(x, params):
    x = x.reshape(x.shape[0], -1)
    h = jnp.maximum(x @ params["w1"] + params["b1"], 0.0)
    h = jnp.maximum(h @ params["w2"] + params["b2"], 0.0)
    h = jnp.maximum(h @ params["w3"] + params["b3"], 0.0)
    return h @ params["w4"] + params["b4"]


if __name__ == "__main__":
    state_dim = 8       # flappy-bird style low-dimensional state
    n_actions = 2       # {do nothing, flap}

    key = jax.random.PRNGKey(0)
    k_param, k_small, k_big = jax.random.split(key, 3)
    params = init_params(k_param, state_dim, n_actions)

    # Case 1: tiny batch (single-ish inference; tile shrinks to 8 rows).
    x_small = jax.random.normal(k_small, (8, state_dim), dtype=jnp.float32)
    out_small = jax.block_until_ready(flappy_bird_mlp_forward(x_small, params))
    ref_small = reference_forward(x_small, params)
    assert out_small.shape == (8, n_actions)
    assert jnp.allclose(out_small, ref_small, atol=1e-4, rtol=1e-4), \
        "small-batch mismatch vs JAX reference"

    # Case 2: batched rollout with a batch that is NOT a multiple of the tile
    # (exercises padding, the 1-D batch grid, and resident-weight BlockSpecs).
    x_big = jax.random.normal(k_big, (300, state_dim), dtype=jnp.float32)
    out_big = jax.block_until_ready(flappy_bird_mlp_forward(x_big, params))
    ref_big = reference_forward(x_big, params)
    assert out_big.shape == (300, n_actions)
    assert jnp.allclose(out_big, ref_big, atol=1e-4, rtol=1e-4), \
        "batched mismatch vs JAX reference"

    print("KERNEL_OK")
</pallas_src>

<mosaic_0001>
module attributes {stable_mosaic.version = 11 : i64} {
  func.func @_mlp_kernel(%arg0: i32, %arg1: memref<8x8xf32, #tpu.memory_space<vmem>>, %arg2: memref<8x128xf32, #tpu.memory_space<vmem>>, %arg3: memref<1x128xf32, #tpu.memory_space<vmem>>, %arg4: memref<128x128xf32, #tpu.memory_space<vmem>>, %arg5: memref<1x128xf32, #tpu.memory_space<vmem>>, %arg6: memref<128x128xf32, #tpu.memory_space<vmem>>, %arg7: memref<1x128xf32, #tpu.memory_space<vmem>>, %arg8: memref<128x128xf32, #tpu.memory_space<vmem>>, %arg9: memref<1x128xf32, #tpu.memory_space<vmem>>, %arg10: memref<8x128xf32, #tpu.memory_space<vmem>>) attributes {dimension_semantics = [#tpu.dimension_semantics<parallel>], iteration_bounds = array<i64: 1>, scalar_prefetch = 0 : i64, scratch_operands = 0 : i64, tpu.core_type = #tpu.core_type<tc>, window_params = [{transform_indices = @transform_0, window_bounds = array<i64: 8, 8>}, {pipeline_mode = #tpu.pipeline_mode<synchronous>, transform_indices = @transform_1, window_bounds = array<i64: 8, 128>}, {pipeline_mode = #tpu.pipeline_mode<synchronous>, transform_indices = @transform_2, window_bounds = array<i64: 1, 128>}, {pipeline_mode = #tpu.pipeline_mode<synchronous>, transform_indices = @transform_3, window_bounds = array<i64: 128, 128>}, {pipeline_mode = #tpu.pipeline_mode<synchronous>, transform_indices = @transform_4, window_bounds = array<i64: 1, 128>}, {pipeline_mode = #tpu.pipeline_mode<synchronous>, transform_indices = @transform_5, window_bounds = array<i64: 128, 128>}, {pipeline_mode = #tpu.pipeline_mode<synchronous>, transform_indices = @transform_6, window_bounds = array<i64: 1, 128>}, {pipeline_mode = #tpu.pipeline_mode<synchronous>, transform_indices = @transform_7, window_bounds = array<i64: 128, 128>}, {pipeline_mode = #tpu.pipeline_mode<synchronous>, transform_indices = @transform_8, window_bounds = array<i64: 1, 128>}, {transform_indices = @transform_9, window_bounds = array<i64: 8, 128>}]} {
    %c0 = arith.constant 0 : index
    %c0_0 = arith.constant 0 : index
    %0 = vector.load %arg1[%c0, %c0_0] : memref<8x8xf32, #tpu.memory_space<vmem>>, vector<8x8xf32>
    %c0_1 = arith.constant 0 : index
    %c0_2 = arith.constant 0 : index
    %1 = vector.load %arg2[%c0_1, %c0_2] : memref<8x128xf32, #tpu.memory_space<vmem>>, vector<8x128xf32>
    %cst = arith.constant dense<0.000000e+00> : vector<8x128xf32>
    %2 = tpu.matmul %0, %1, %cst {dimension_numbers = #tpu.dot_dimension_numbers<[1], [0], [0], [1], [0, 0, 1, 1], [], []>} : vector<8x8xf32>, vector<8x128xf32>, vector<8x128xf32> -> vector<8x128xf32>
    %c0_3 = arith.constant 0 : index
    %c0_4 = arith.constant 0 : index
    %3 = vector.load %arg3[%c0_3, %c0_4] : memref<1x128xf32, #tpu.memory_space<vmem>>, vector<1x128xf32>
    %4 = vector.broadcast %3 : vector<1x128xf32> to vector<8x128xf32>
    %5 = arith.addf %2, %4 : vector<8x128xf32>
    %cst_5 = arith.constant 0.000000e+00 : f32
    %6 = vector.broadcast %cst_5 : f32 to vector<8x128xf32>
    %7 = arith.maximumf %5, %6 : vector<8x128xf32>
    %c0_6 = arith.constant 0 : index
    %c0_7 = arith.constant 0 : index
    %8 = vector.load %arg4[%c0_6, %c0_7] : memref<128x128xf32, #tpu.memory_space<vmem>>, vector<128x128xf32>
    %cst_8 = arith.constant dense<0.000000e+00> : vector<8x128xf32>
    %9 = tpu.matmul %7, %8, %cst_8 {dimension_numbers = #tpu.dot_dimension_numbers<[1], [0], [0], [1], [0, 0, 1, 1], [], []>} : vector<8x128xf32>, vector<128x128xf32>, vector<8x128xf32> -> vector<8x128xf32>
    %c0_9 = arith.constant 0 : index
    %c0_10 = arith.constant 0 : index
    %10 = vector.load %arg5[%c0_9, %c0_10] : memref<1x128xf32, #tpu.memory_space<vmem>>, vector<1x128xf32>
    %11 = vector.broadcast %10 : vector<1x128xf32> to vector<8x128xf32>
    %12 = arith.addf %9, %11 : vector<8x128xf32>
    %cst_11 = arith.constant 0.000000e+00 : f32
    %13 = vector.broadcast %cst_11 : f32 to vector<8x128xf32>
    %14 = arith.maximumf %12, %13 : vector<8x128xf32>
    %c0_12 = arith.constant 0 : index
    %c0_13 = arith.constant 0 : index
    %15 = vector.load %arg6[%c0_12, %c0_13] : memref<128x128xf32, #tpu.memory_space<vmem>>, vector<128x128xf32>
    %cst_14 = arith.constant dense<0.000000e+00> : vector<8x128xf32>
    %16 = tpu.matmul %14, %15, %cst_14 {dimension_numbers = #tpu.dot_dimension_numbers<[1], [0], [0], [1], [0, 0, 1, 1], [], []>} : vector<8x128xf32>, vector<128x128xf32>, vector<8x128xf32> -> vector<8x128xf32>
    %c0_15 = arith.constant 0 : index
    %c0_16 = arith.constant 0 : index
    %17 = vector.load %arg7[%c0_15, %c0_16] : memref<1x128xf32, #tpu.memory_space<vmem>>, vector<1x128xf32>
    %18 = vector.broadcast %17 : vector<1x128xf32> to vector<8x128xf32>
    %19 = arith.addf %16, %18 : vector<8x128xf32>
    %cst_17 = arith.constant 0.000000e+00 : f32
    %20 = vector.broadcast %cst_17 : f32 to vector<8x128xf32>
    %21 = arith.maximumf %19, %20 : vector<8x128xf32>
    %c0_18 = arith.constant 0 : index
    %c0_19 = arith.constant 0 : index
    %22 = vector.load %arg8[%c0_18, %c0_19] : memref<128x128xf32, #tpu.memory_space<vmem>>, vector<128x128xf32>
    %cst_20 = arith.constant dense<0.000000e+00> : vector<8x128xf32>
    %23 = tpu.matmul %21, %22, %cst_20 {dimension_numbers = #tpu.dot_dimension_numbers<[1], [0], [0], [1], [0, 0, 1, 1], [], []>} : vector<8x128xf32>, vector<128x128xf32>, vector<8x128xf32> -> vector<8x128xf32>
    %c0_21 = arith.constant 0 : index
    %c0_22 = arith.constant 0 : index
    %24 = vector.load %arg9[%c0_21, %c0_22] : memref<1x128xf32, #tpu.memory_space<vmem>>, vector<1x128xf32>
    %25 = vector.broadcast %24 : vector<1x128xf32> to vector<8x128xf32>
    %26 = arith.addf %23, %25 : vector<8x128xf32>
    %c0_23 = arith.constant 0 : index
    %c0_24 = arith.constant 0 : index
    %27 = vector.load %arg10[%c0_23, %c0_24] : memref<8x128xf32, #tpu.memory_space<vmem>>, vector<8x128xf32>
    tpu.vector_store %arg10[%c0_23, %c0_24], %26 {strides = array<i32>} : memref<8x128xf32, #tpu.memory_space<vmem>>, vector<8x128xf32>,
    return
  }
  func.func @transform_0(%arg0: i32) -> (i32, i32) {
    %c0_i32 = arith.constant 0 : i32
    %c0_i32_0 = arith.constant 0 : i32
    return %arg0, %c0_i32 : i32, i32
  }
  func.func @transform_1(%arg0: i32) -> (i32, i32) {
    %c0_i32 = arith.constant 0 : i32
    %c0_i32_0 = arith.constant 0 : i32
    %c0_i32_1 = arith.constant 0 : i32
    return %c0_i32, %c0_i32_0 : i32, i32
  }
  func.func @transform_2(%arg0: i32) -> (i32, i32) {
    %c0_i32 = arith.constant 0 : i32
    %c0_i32_0 = arith.constant 0 : i32
    %c0_i32_1 = arith.constant 0 : i32
    return %c0_i32, %c0_i32_0 : i32, i32
  }
  func.func @transform_3(%arg0: i32) -> (i32, i32) {
    %c0_i32 = arith.constant 0 : i32
    %c0_i32_0 = arith.constant 0 : i32
    %c0_i32_1 = arith.constant 0 : i32
    return %c0_i32, %c0_i32_0 : i32, i32
  }
  func.func @transform_4(%arg0: i32) -> (i32, i32) {
    %c0_i32 = arith.constant 0 : i32
    %c0_i32_0 = arith.constant 0 : i32
    %c0_i32_1 = arith.constant 0 : i32
    return %c0_i32, %c0_i32_0 : i32, i32
  }
  func.func @transform_5(%arg0: i32) -> (i32, i32) {
    %c0_i32 = arith.constant 0 : i32
    %c0_i32_0 = arith.constant 0 : i32
    %c0_i32_1 = arith.constant 0 : i32
    return %c0_i32, %c0_i32_0 : i32, i32
  }
  func.func @transform_6(%arg0: i32) -> (i32, i32) {
    %c0_i32 = arith.constant 0 : i32
    %c0_i32_0 = arith.constant 0 : i32
    %c0_i32_1 = arith.constant 0 : i32
    return %c0_i32, %c0_i32_0 : i32, i32
  }
  func.func @transform_7(%arg0: i32) -> (i32, i32) {
    %c0_i32 = arith.constant 0 : i32
    %c0_i32_0 = arith.constant 0 : i32
    %c0_i32_1 = arith.constant 0 : i32
    return %c0_i32, %c0_i32_0 : i32, i32
  }
  func.func @transform_8(%arg0: i32) -> (i32, i32) {
    %c0_i32 = arith.constant 0 : i32
    %c0_i32_0 = arith.constant 0 : i32
    %c0_i32_1 = arith.constant 0 : i32
    return %c0_i32, %c0_i32_0 : i32, i32
  }
  func.func @transform_9(%arg0: i32) -> (i32, i32) {
    %c0_i32 = arith.constant 0 : i32
    %c0_i32_0 = arith.constant 0 : i32
    return %arg0, %c0_i32 : i32, i32
  }
}

</mosaic_0001>

<llo_original>
// kernel: tpu_custom_call.1
$region0: #{tpu_custom_call.1}
  #allocation0 [shape = 'u32[]', space=smem, size = 0x4, offset = 0x4, fixed_abs, tag = 'smem constant byte address 0x4 - core index']
  #allocation1 [shape = 'u32[144,128]{1,0:T(1,128)}', space=vmem, size = 0x12000, scoped, tag = 'internal scratch']
  %s0 = inlined_call_operand.hbm [shape: f32[8,8], index: 0, kind: input, shape index: {}]
  %s1 = inlined_call_operand.hbm [shape: f32[8,128], index: 1, kind: input, shape index: {}]
  %s2 = inlined_call_operand.vmem [shape: f32[1,128], index: 2, kind: input, shape index: {}]
  %s3 = inlined_call_operand.hbm [shape: f32[128,128], index: 3, kind: input, shape index: {}]
  %s4 = inlined_call_operand.vmem [shape: f32[1,128], index: 4, kind: input, shape index: {}]
  %s5 = inlined_call_operand.hbm [shape: f32[128,128], index: 5, kind: input, shape index: {}]
  %s6 = inlined_call_operand.vmem [shape: f32[1,128], index: 6, kind: input, shape index: {}]
  %s7 = inlined_call_operand.hbm [shape: f32[128,128], index: 7, kind: input, shape index: {}]
  %s8 = inlined_call_operand.vmem [shape: f32[1,128], index: 8, kind: input, shape index: {}]
  %s9 = inlined_call_operand.hbm [shape: f32[8,128], index: 9, kind: output, shape index: {}]
  %s10 = sld [smem:[#allocation0]]
  $region66: #{tpu_custom_call.1} parent=0
    _
  %s12 = ssub.s32 1, %s10
  %s13 = scalar_select 0, %s12, %s10
  $region1: #{tpu_custom_call.1} parent=0
    #allocation2 [shape = 'u8[4096]{0}', space=vmem, size = 0x1000, scoped, tag = 'input window, operand 0, single buffered']
    #allocation3 [shape = 's32[1]{0}', space=sflag, size = 0x4, scoped, tag = 'scoped memory for tpu_custom_call.1']
    #allocation4 [shape = 's32[1]{0}', space=sflag, size = 0x4, scoped, tag = 'scoped memory for tpu_custom_call.1']
    #allocation5 [shape = 'u8[4096]{0}', space=vmem, size = 0x1000, scoped, tag = 'input window, operand 1, single buffered']
    #allocation6 [shape = 's32[1]{0}', space=sflag, size = 0x4, scoped, tag = 'scoped memory for tpu_custom_call.1']
    #allocation7 [shape = 'u8[65536]{0}', space=vmem, size = 0x10000, scoped, tag = 'input window, operand 3, single buffered']
    #allocation8 [shape = 'u8[65536]{0}', space=vmem, size = 0x10000, scoped, tag = 'input window, operand 5, single buffered']
    #allocation9 [shape = 's32[1]{0}', space=sflag, size = 0x4, scoped, tag = 'scoped memory for tpu_custom_call.1']
    #allocation10 [shape = 'u8[65536]{0}', space=vmem, size = 0x10000, scoped, tag = 'input window, operand 7, single buffered']
    #allocation11 [shape = 'u8[4096]{0}', space=vmem, size = 0x1000, scoped, tag = 'output window, operand 0, single buffered']
    %14 = vsyncpa [#allocation3], 0
    %15 = vsyncpa [#allocation6], 0
    %16 = vsyncpa [#allocation9], 0
    %17 = vsyncpa [#allocation4], 0
    // Predicated region
    $region2: #{tpu_custom_call.1} parent=1 // pred_check
      _
    $region3: #{tpu_custom_call.1} parent=1 // pred_check_branch
      %19 = sbr.rel (0) target = $region5
    $region4: #{tpu_custom_call.1} parent=1 // pred_region
      %s21 = ssub.s32 128, 128
      %22 = vsyncadd [#allocation3], %s21
      %s24 = sshll.u32 [#allocation2], 4
      %s25 = int_to_ptr.vmem [resolvable:$true] %s24
      %27 = dma.hbm_to_vmem [thread:$0]  %s0, 128, %s25, [#allocation3]
    $region5: #{tpu_custom_call.1} parent=1 // pred_fallthru
      _
    // Predicated region
    $region6: #{tpu_custom_call.1} parent=1 // pred_check
      _
    $region7: #{tpu_custom_call.1} parent=1 // pred_check_branch
      %29 = sbr.rel (0) target = $region9
    $region8: #{tpu_custom_call.1} parent=1 // pred_region
      %s31 = ssub.s32 128, 128
      %32 = vsyncadd [#allocation6], %s31
      %s34 = sshll.u32 [#allocation5], 4
      %s35 = int_to_ptr.vmem [resolvable:$true] %s34
      %37 = dma.hbm_to_vmem [thread:$0]  %s1, 128, %s35, [#allocation6]
    $region9: #{tpu_custom_call.1} parent=1 // pred_fallthru
      _
    // Predicated region
    $region10: #{tpu_custom_call.1} parent=1 // pred_check
      _
    $region11: #{tpu_custom_call.1} parent=1 // pred_check_branch
      %39 = sbr.rel (0) target = $region13
    $region12: #{tpu_custom_call.1} parent=1 // pred_region
      _
    $region13: #{tpu_custom_call.1} parent=1 // pred_fallthru
      _
    // Predicated region
    $region14: #{tpu_custom_call.1} parent=1 // pred_check
      _
    $region15: #{tpu_custom_call.1} parent=1 // pred_check_branch
      %41 = sbr.rel (0) target = $region17
    $region16: #{tpu_custom_call.1} parent=1 // pred_region
      %s43 = ssub.s32 2048, 2048
      %44 = vsyncadd [#allocation6], %s43
      %s45 = sshll.u32 [#allocation7], 4
      %s46 = int_to_ptr.vmem [resolvable:$true] %s45
      %51 = dma.hbm_to_vmem [thread:$0]  %s3, 2048, %s46, [#allocation6], 128, 128, 8
    $region17: #{tpu_custom_call.1} parent=1 // pred_fallthru
      _
    // Predicated region
    $region18: #{tpu_custom_call.1} parent=1 // pred_check
      _
    $region19: #{tpu_custom_call.1} parent=1 // pred_check_branch
      %53 = sbr.rel (0) target = $region21
    $region20: #{tpu_custom_call.1} parent=1 // pred_region
      _
    $region21: #{tpu_custom_call.1} parent=1 // pred_fallthru
      _
    // Predicated region
    $region22: #{tpu_custom_call.1} parent=1 // pred_check
      _
    $region23: #{tpu_custom_call.1} parent=1 // pred_check_branch
      %55 = sbr.rel (0) target = $region25
    $region24: #{tpu_custom_call.1} parent=1 // pred_region
      %s57 = ssub.s32 2048, 2048
      %58 = vsyncadd [#allocation9], %s57
      %s59 = sshll.u32 [#allocation8], 4
      %s60 = int_to_ptr.vmem [resolvable:$true] %s59
      %65 = dma.hbm_to_vmem [thread:$0]  %s5, 2048, %s60, [#allocation9], 128, 128, 8
    $region25: #{tpu_custom_call.1} parent=1 // pred_fallthru
      _
    // Predicated region
    $region26: #{tpu_custom_call.1} parent=1 // pred_check
      _
    $region27: #{tpu_custom_call.1} parent=1 // pred_check_branch
      %67 = sbr.rel (0) target = $region29
    $region28: #{tpu_custom_call.1} parent=1 // pred_region
      _
    $region29: #{tpu_custom_call.1} parent=1 // pred_fallthru
      _
    // Predicated region
    $region30: #{tpu_custom_call.1} parent=1 // pred_check
      _
    $region31: #{tpu_custom_call.1} parent=1 // pred_check_branch
      %69 = sbr.rel (0) target = $region33
    $region32: #{tpu_custom_call.1} parent=1 // pred_region
      %s71 = ssub.s32 2048, 2048
      %72 = vsyncadd [#allocation9], %s71
      %s73 = sshll.u32 [#allocation10], 4
      %s74 = int_to_ptr.vmem [resolvable:$true] %s73
      %79 = dma.hbm_to_vmem [thread:$0]  %s7, 2048, %s74, [#allocation9], 128, 128, 8
    $region33: #{tpu_custom_call.1} parent=1 // pred_fallthru
      _
    // Predicated region
    $region34: #{tpu_custom_call.1} parent=1 // pred_check
      _
    $region35: #{tpu_custom_call.1} parent=1 // pred_check_branch
      %81 = sbr.rel (0) target = $region37
    $region36: #{tpu_custom_call.1} parent=1 // pred_region
      _
    $region37: #{tpu_custom_call.1} parent=1 // pred_fallthru
      _
    // Predicated region
    $region38: #{tpu_custom_call.1} parent=1 // pred_check
      _
    $region39: #{tpu_custom_call.1} parent=1 // pred_check_branch
      %83 = sbr.rel (0) target = $region41
    $region40: #{tpu_custom_call.1} parent=1 // pred_region
      %84 = dma.done [#allocation3], 128
    $region41: #{tpu_custom_call.1} parent=1 // pred_fallthru
      _
    // Predicated region
    $region42: #{tpu_custom_call.1} parent=1 // pred_check
      _
    $region43: #{tpu_custom_call.1} parent=1 // pred_check_branch
      %86 = sbr.rel (0) target = $region45
    $region44: #{tpu_custom_call.1} parent=1 // pred_region
      %87 = dma.done [#allocation6], 128
    $region45: #{tpu_custom_call.1} parent=1 // pred_fallthru
      _
    // Predicated region
    $region46: #{tpu_custom_call.1} parent=1 // pred_check
      _
    $region47: #{tpu_custom_call.1} parent=1 // pred_check_branch
      %89 = sbr.rel (0) target = $region49
    $region48: #{tpu_custom_call.1} parent=1 // pred_region
      %90 = dma.done [#allocation6], 2048
    $region49: #{tpu_custom_call.1} parent=1 // pred_fallthru
      _
    // Predicated region
    $region50: #{tpu_custom_call.1} parent=1 // pred_check
      _
    $region51: #{tpu_custom_call.1} parent=1 // pred_check_branch
      %92 = sbr.rel (0) target = $region53
    $region52: #{tpu_custom_call.1} parent=1 // pred_region
      %93 = dma.done [#allocation9], 2048
    $region53: #{tpu_custom_call.1} parent=1 // pred_fallthru
      _
    // Predicated region
    $region54: #{tpu_custom_call.1} parent=1 // pred_check
      _
    $region55: #{tpu_custom_call.1} parent=1 // pred_check_branch
      %95 = sbr.rel (0) target = $region57
    $region56: #{tpu_custom_call.1} parent=1 // pred_region
      %96 = dma.done [#allocation9], 2048
    $region57: #{tpu_custom_call.1} parent=1 // pred_fallthru
      _
    %v97 = vld [vmem:[#allocation2] sm:$0xff]
    %v98 = vld [vmem:[#allocation5] sm:$0xff]
    %v99 = vld [vmem:[%s2] sm:$0x1]
    %v101 = vlaneseq
    %v102 = vshrl.u32 %v101, 7
    %v103 = vsub.s32 0, %v102
    %v104 = vrot.slane %v99, %v103
    %vm106 = vcmask 64512
    %v108 = vsel %vm106, %v97, 0
    %110 = vmatprep.subr.mxu0 0.0
    %111 = vmatpush1.msra.mxu0 0.0
    %112 = vmatprep.subr.mxu0 0.0
    %113 = vmatpush1.msra.mxu0 0.0
    %114 = vmatprep.subr.mxu0 0.0
    %115 = vmatpush1.msra.mxu0 0.0
    %116 = vmatprep.subr.mxu0 0.0
    %117 = vmatpush1.msra.mxu0 0.0
    %118 = vmatprep.subr.mxu0 0.0
    %119 = vmatpush1.msra.mxu0 0.0
    %120 = vmatprep.subr.mxu0 0.0
    %121 = vmatpush1.msra.mxu0 0.0
    %122 = vmatprep.subr.mxu0 0.0
    %123 = vmatpush1.msra.mxu0 0.0
    %124 = vmatprep.subr.mxu0 0.0
    %125 = vmatpush1.msra.mxu0 0.0
    %126 = vmatprep.subr.mxu0 0.0
    %127 = vmatpush1.msra.mxu0 0.0
    %128 = vmatprep.subr.mxu0 0.0
    %129 = vmatpush1.msra.mxu0 0.0
    %130 = vmatprep.subr.mxu0 0.0
    %131 = vmatpush1.msra.mxu0 0.0
    %132 = vmatprep.subr.mxu0 0.0
    %133 = vmatpush1.msra.mxu0 0.0
    %134 = vmatprep.subr.mxu0 0.0
    %135 = vmatpush1.msra.mxu0 0.0
    %136 = vmatprep.subr.mxu0 0.0
    %137 = vmatpush1.msra.mxu0 0.0
    %138 = vmatprep.subr.mxu0 0.0
    %139 = vmatpush1.msra.mxu0 0.0
    %140 = vmatprep.subr.mxu0 0.0
    %141 = vmatpush1.msra.mxu0 %v98
    %142 = vmatprep.subr.mxu0 0.0
    %143 = vmatpush2.msra.mxu0 0.0
    %144 = vmatprep.subr.mxu0 0.0
    %145 = vmatpush2.msra.mxu0 0.0
    %146 = vmatprep.subr.mxu0 0.0
    %147 = vmatpush2.msra.mxu0 0.0
    %148 = vmatprep.subr.mxu0 0.0
    %149 = vmatpush2.msra.mxu0 0.0
    %150 = vmatprep.subr.mxu0 0.0
    %151 = vmatpush2.msra.mxu0 0.0
    %152 = vmatprep.subr.mxu0 0.0
    %153 = vmatpush2.msra.mxu0 0.0
    %154 = vmatprep.subr.mxu0 0.0
    %155 = vmatpush2.msra.mxu0 0.0
    %156 = vmatprep.subr.mxu0 0.0
    %157 = vmatpush2.msra.mxu0 0.0
    %158 = vmatprep.subr.mxu0 0.0
    %159 = vmatpush2.msra.mxu0 0.0
    %160 = vmatprep.subr.mxu0 0.0
    %161 = vmatpush2.msra.mxu0 0.0
    %162 = vmatprep.subr.mxu0 0.0
    %163 = vmatpush2.msra.mxu0 0.0
    %164 = vmatprep.subr.mxu0 0.0
    %165 = vmatpush2.msra.mxu0 0.0
    %166 = vmatprep.subr.mxu0 0.0
    %167 = vmatpush2.msra.mxu0 0.0
    %168 = vmatprep.subr.mxu0 0.0
    %169 = vmatpush2.msra.mxu0 0.0
    %170 = vmatprep.subr.mxu0 0.0
    %171 = vmatpush2.msra.mxu0 0.0
    %172 = vmatprep.subr.mxu0 0.0
    %173 = vmatpush2.msra.mxu0 0.0
    %174 = vmatprep.mubr.f32.mxu0 0.0
    %175 = vmatmul.mubr.f32.gmra.mxu0 %v108
    %v176 = vpop.f32.mrf.mxu0
    %v177 = vadd.f32 %v104, %v176
    %v178 = vpop.f32.mrf.mxu0
    %179 = vdwg.mxu0
    %v180 = vmax.f32 %v177, 0.0
    %v181 = vld [vmem:[#allocation7] sm:$0xff]
    %v182 = vld [vmem:[#allocation7 + $0x8] sm:$0xff]
    %v183 = vld [vmem:[#allocation7 + $0x10] sm:$0xff]
    %v184 = vld [vmem:[#allocation7 + $0x18] sm:$0xff]
    %v185 = vld [vmem:[#allocation7 + $0x20] sm:$0xff]
    %v186 = vld [vmem:[#allocation7 + $0x28] sm:$0xff]
    %v187 = vld [vmem:[#allocation7 + $0x30] sm:$0xff]
    %v188 = vld [vmem:[#allocation7 + $0x38] sm:$0xff]
    %v189 = vld [vmem:[#allocation7 + $0x40] sm:$0xff]
    %v190 = vld [vmem:[#allocation7 + $0x48] sm:$0xff]
    %v191 = vld [vmem:[#allocation7 + $0x50] sm:$0xff]
    %v192 = vld [vmem:[#allocation7 + $0x58] sm:$0xff]
    %v193 = vld [vmem:[#allocation7 + $0x60] sm:$0xff]
    %v194 = vld [vmem:[#allocation7 + $0x68] sm:$0xff]
    %v195 = vld [vmem:[#allocation7 + $0x70] sm:$0xff]
    %v196 = vld [vmem:[#allocation7 + $0x78] sm:$0xff]
    %v197 = vld [vmem:[%s4] sm:$0x1]
    %v199 = vlaneseq
    %v200 = vshrl.u32 %v199, 7
    %v201 = vsub.s32 0, %v200
    %v202 = vrot.slane %v197, %v201
    %204 = vmatprep.subr.mxu0 0.0
    %205 = vmatpush1.msra.mxu0 %v196
    %206 = vmatprep.subr.mxu0 0.0
    %207 = vmatpush1.msra.mxu0 %v195
    %208 = vmatprep.subr.mxu0 0.0
    %209 = vmatpush1.msra.mxu0 %v194
    %210 = vmatprep.subr.mxu0 0.0
    %211 = vmatpush1.msra.mxu0 %v193
    %212 = vmatprep.subr.mxu0 0.0
    %213 = vmatpush1.msra.mxu0 %v192
    %214 = vmatprep.subr.mxu0 0.0
    %215 = vmatpush1.msra.mxu0 %v191
    %216 = vmatprep.subr.mxu0 0.0
    %217 = vmatpush1.msra.mxu0 %v190
    %218 = vmatprep.subr.mxu0 0.0
    %219 = vmatpush1.msra.mxu0 %v189
    %220 = vmatprep.subr.mxu0 0.0
    %221 = vmatpush1.msra.mxu0 %v188
    %222 = vmatprep.subr.mxu0 0.0
    %223 = vmatpush1.msra.mxu0 %v187
    %224 = vmatprep.subr.mxu0 0.0
    %225 = vmatpush1.msra.mxu0 %v186
    %226 = vmatprep.subr.mxu0 0.0
    %227 = vmatpush1.msra.mxu0 %v185
    %228 = vmatprep.subr.mxu0 0.0
    %229 = vmatpush1.msra.mxu0 %v184
    %230 = vmatprep.subr.mxu0 0.0
    %231 = vmatpush1.msra.mxu0 %v183
    %232 = vmatprep.subr.mxu0 0.0
    %233 = vmatpush1.msra.mxu0 %v182
    %234 = vmatprep.subr.mxu0 0.0
    %235 = vmatpush1.msra.mxu0 %v181
    %236 = vmatprep.subr.mxu0 0.0
    %237 = vmatpush2.msra.mxu0 0.0
    %238 = vmatprep.subr.mxu0 0.0
    %239 = vmatpush2.msra.mxu0 0.0
    %240 = vmatprep.subr.mxu0 0.0
    %241 = vmatpush2.msra.mxu0 0.0
    %242 = vmatprep.subr.mxu0 0.0
    %243 = vmatpush2.msra.mxu0 0.0
    %244 = vmatprep.subr.mxu0 0.0
    %245 = vmatpush2.msra.mxu0 0.0
    %246 = vmatprep.subr.mxu0 0.0
    %247 = vmatpush2.msra.mxu0 0.0
    %248 = vmatprep.subr.mxu0 0.0
    %249 = vmatpush2.msra.mxu0 0.0
    %250 = vmatprep.subr.mxu0 0.0
    %251 = vmatpush2.msra.mxu0 0.0
    %252 = vmatprep.subr.mxu0 0.0
    %253 = vmatpush2.msra.mxu0 0.0
    %254 = vmatprep.subr.mxu0 0.0
    %255 = vmatpush2.msra.mxu0 0.0
    %256 = vmatprep.subr.mxu0 0.0
    %257 = vmatpush2.msra.mxu0 0.0
    %258 = vmatprep.subr.mxu0 0.0
    %259 = vmatpush2.msra.mxu0 0.0
    %260 = vmatprep.subr.mxu0 0.0
    %261 = vmatpush2.msra.mxu0 0.0
    %262 = vmatprep.subr.mxu0 0.0
    %263 = vmatpush2.msra.mxu0 0.0
    %264 = vmatprep.subr.mxu0 0.0
    %265 = vmatpush2.msra.mxu0 0.0
    %266 = vmatprep.subr.mxu0 0.0
    %267 = vmatpush2.msra.mxu0 0.0
    %268 = vmatprep.mubr.f32.mxu0 0.0
    %269 = vmatmul.mubr.f32.gmra.mxu0 %v180
    %v270 = vpop.f32.mrf.mxu0
    %v271 = vadd.f32 %v202, %v270
    %v272 = vpop.f32.mrf.mxu0
    %273 = vdwg.mxu0
    %v274 = vmax.f32 %v271, 0.0
    %v275 = vld [vmem:[#allocation8] sm:$0xff]
    %v276 = vld [vmem:[#allocation8 + $0x8] sm:$0xff]
    %v277 = vld [vmem:[#allocation8 + $0x10] sm:$0xff]
    %v278 = vld [vmem:[#allocation8 + $0x18] sm:$0xff]
    %v279 = vld [vmem:[#allocation8 + $0x20] sm:$0xff]
    %v280 = vld [vmem:[#allocation8 + $0x28] sm:$0xff]
    %v281 = vld [vmem:[#allocation8 + $0x30] sm:$0xff]
    %v282 = vld [vmem:[#allocation8 + $0x38] sm:$0xff]
    %v283 = vld [vmem:[#allocation8 + $0x40] sm:$0xff]
    %v284 = vld [vmem:[#allocation8 + $0x48] sm:$0xff]
    %v285 = vld [vmem:[#allocation8 + $0x50] sm:$0xff]
    %v286 = vld [vmem:[#allocation8 + $0x58] sm:$0xff]
    %v287 = vld [vmem:[#allocation8 + $0x60] sm:$0xff]
    %v288 = vld [vmem:[#allocation8 + $0x68] sm:$0xff]
    %v289 = vld [vmem:[#allocation8 + $0x70] sm:$0xff]
    %v290 = vld [vmem:[#allocation8 + $0x78] sm:$0xff]
    %v291 = vld [vmem:[%s6] sm:$0x1]
    %v293 = vlaneseq
    %v294 = vshrl.u32 %v293, 7
    %v295 = vsub.s32 0, %v294
    %v296 = vrot.slane %v291, %v295
    %298 = vmatprep.subr.mxu0 0.0
    %299 = vmatpush1.msra.mxu0 %v290
    %300 = vmatprep.subr.mxu0 0.0
    %301 = vmatpush1.msra.mxu0 %v289
    %302 = vmatprep.subr.mxu0 0.0
    %303 = vmatpush1.msra.mxu0 %v288
    %304 = vmatprep.subr.mxu0 0.0
    %305 = vmatpush1.msra.mxu0 %v287
    %306 = vmatprep.subr.mxu0 0.0
    %307 = vmatpush1.msra.mxu0 %v286
    %308 = vmatprep.subr.mxu0 0.0
    %309 = vmatpush1.msra.mxu0 %v285
    %310 = vmatprep.subr.mxu0 0.0
    %311 = vmatpush1.msra.mxu0 %v284
    %312 = vmatprep.subr.mxu0 0.0
    %313 = vmatpush1.msra.mxu0 %v283
    %314 = vmatprep.subr.mxu0 0.0
    %315 = vmatpush1.msra.mxu0 %v282
    %316 = vmatprep.subr.mxu0 0.0
    %317 = vmatpush1.msra.mxu0 %v281
    %318 = vmatprep.subr.mxu0 0.0
    %319 = vmatpush1.msra.mxu0 %v280
    %320 = vmatprep.subr.mxu0 0.0
    %321 = vmatpush1.msra.mxu0 %v279
    %322 = vmatprep.subr.mxu0 0.0
    %323 = vmatpush1.msra.mxu0 %v278
    %324 = vmatprep.subr.mxu0 0.0
    %325 = vmatpush1.msra.mxu0 %v277
    %326 = vmatprep.subr.mxu0 0.0
    %327 = vmatpush1.msra.mxu0 %v276
    %328 = vmatprep.subr.mxu0 0.0
    %329 = vmatpush1.msra.mxu0 %v275
    %330 = vmatprep.subr.mxu0 0.0
    %331 = vmatpush2.msra.mxu0 0.0
    %332 = vmatprep.subr.mxu0 0.0
    %333 = vmatpush2.msra.mxu0 0.0
    %334 = vmatprep.subr.mxu0 0.0
    %335 = vmatpush2.msra.mxu0 0.0
    %336 = vmatprep.subr.mxu0 0.0
    %337 = vmatpush2.msra.mxu0 0.0
    %338 = vmatprep.subr.mxu0 0.0
    %339 = vmatpush2.msra.mxu0 0.0
    %340 = vmatprep.subr.mxu0 0.0
    %341 = vmatpush2.msra.mxu0 0.0
    %342 = vmatprep.subr.mxu0 0.0
    %343 = vmatpush2.msra.mxu0 0.0
    %344 = vmatprep.subr.mxu0 0.0
    %345 = vmatpush2.msra.mxu0 0.0
    %346 = vmatprep.subr.mxu0 0.0
    %347 = vmatpush2.msra.mxu0 0.0
    %348 = vmatprep.subr.mxu0 0.0
    %349 = vmatpush2.msra.mxu0 0.0
    %350 = vmatprep.subr.mxu0 0.0
    %351 = vmatpush2.msra.mxu0 0.0
    %352 = vmatprep.subr.mxu0 0.0
    %353 = vmatpush2.msra.mxu0 0.0
    %354 = vmatprep.subr.mxu0 0.0
    %355 = vmatpush2.msra.mxu0 0.0
    %356 = vmatprep.subr.mxu0 0.0
    %357 = vmatpush2.msra.mxu0 0.0
    %358 = vmatprep.subr.mxu0 0.0
    %359 = vmatpush2.msra.mxu0 0.0
    %360 = vmatprep.subr.mxu0 0.0
    %361 = vmatpush2.msra.mxu0 0.0
    %362 = vmatprep.mubr.f32.mxu0 0.0
    %363 = vmatmul.mubr.f32.gmra.mxu0 %v274
    %v364 = vpop.f32.mrf.mxu0
    %v365 = vadd.f32 %v296, %v364
    %v366 = vpop.f32.mrf.mxu0
    %367 = vdwg.mxu0
    %v368 = vmax.f32 %v365, 0.0
    %v369 = vld [vmem:[#allocation10] sm:$0xff]
    %v370 = vld [vmem:[#allocation10 + $0x8] sm:$0xff]
    %v371 = vld [vmem:[#allocation10 + $0x10] sm:$0xff]
    %v372 = vld [vmem:[#allocation10 + $0x18] sm:$0xff]
    %v373 = vld [vmem:[#allocation10 + $0x20] sm:$0xff]
    %v374 = vld [vmem:[#allocation10 + $0x28] sm:$0xff]
    %v375 = vld [vmem:[#allocation10 + $0x30] sm:$0xff]
    %v376 = vld [vmem:[#allocation10 + $0x38] sm:$0xff]
    %v377 = vld [vmem:[#allocation10 + $0x40] sm:$0xff]
    %v378 = vld [vmem:[#allocation10 + $0x48] sm:$0xff]
    %v379 = vld [vmem:[#allocation10 + $0x50] sm:$0xff]
    %v380 = vld [vmem:[#allocation10 + $0x58] sm:$0xff]
    %v381 = vld [vmem:[#allocation10 + $0x60] sm:$0xff]
    %v382 = vld [vmem:[#allocation10 + $0x68] sm:$0xff]
    %v383 = vld [vmem:[#allocation10 + $0x70] sm:$0xff]
    %v384 = vld [vmem:[#allocation10 + $0x78] sm:$0xff]
    %v385 = vld [vmem:[%s8] sm:$0x1]
    %v387 = vlaneseq
    %v388 = vshrl.u32 %v387, 7
    %v389 = vsub.s32 0, %v388
    %v390 = vrot.slane %v385, %v389
    %392 = vmatprep.subr.mxu0 0.0
    %393 = vmatpush1.msra.mxu0 %v384
    %394 = vmatprep.subr.mxu0 0.0
    %395 = vmatpush1.msra.mxu0 %v383
    %396 = vmatprep.subr.mxu0 0.0
    %397 = vmatpush1.msra.mxu0 %v382
    %398 = vmatprep.subr.mxu0 0.0
    %399 = vmatpush1.msra.mxu0 %v381
    %400 = vmatprep.subr.mxu0 0.0
    %401 = vmatpush1.msra.mxu0 %v380
    %402 = vmatprep.subr.mxu0 0.0
    %403 = vmatpush1.msra.mxu0 %v379
    %404 = vmatprep.subr.mxu0 0.0
    %405 = vmatpush1.msra.mxu0 %v378
    %406 = vmatprep.subr.mxu0 0.0
    %407 = vmatpush1.msra.mxu0 %v377
    %408 = vmatprep.subr.mxu0 0.0
    %409 = vmatpush1.msra.mxu0 %v376
    %410 = vmatprep.subr.mxu0 0.0
    %411 = vmatpush1.msra.mxu0 %v375
    %412 = vmatprep.subr.mxu0 0.0
    %413 = vmatpush1.msra.mxu0 %v374
    %414 = vmatprep.subr.mxu0 0.0
    %415 = vmatpush1.msra.mxu0 %v373
    %416 = vmatprep.subr.mxu0 0.0
    %417 = vmatpush1.msra.mxu0 %v372
    %418 = vmatprep.subr.mxu0 0.0
    %419 = vmatpush1.msra.mxu0 %v371
    %420 = vmatprep.subr.mxu0 0.0
    %421 = vmatpush1.msra.mxu0 %v370
    %422 = vmatprep.subr.mxu0 0.0
    %423 = vmatpush1.msra.mxu0 %v369
    %424 = vmatprep.subr.mxu0 0.0
    %425 = vmatpush2.msra.mxu0 0.0
    %426 = vmatprep.subr.mxu0 0.0
    %427 = vmatpush2.msra.mxu0 0.0
    %428 = vmatprep.subr.mxu0 0.0
    %429 = vmatpush2.msra.mxu0 0.0
    %430 = vmatprep.subr.mxu0 0.0
    %431 = vmatpush2.msra.mxu0 0.0
    %432 = vmatprep.subr.mxu0 0.0
    %433 = vmatpush2.msra.mxu0 0.0
    %434 = vmatprep.subr.mxu0 0.0
    %435 = vmatpush2.msra.mxu0 0.0
    %436 = vmatprep.subr.mxu0 0.0
    %437 = vmatpush2.msra.mxu0 0.0
    %438 = vmatprep.subr.mxu0 0.0
    %439 = vmatpush2.msra.mxu0 0.0
    %440 = vmatprep.subr.mxu0 0.0
    %441 = vmatpush2.msra.mxu0 0.0
    %442 = vmatprep.subr.mxu0 0.0
    %443 = vmatpush2.msra.mxu0 0.0
    %444 = vmatprep.subr.mxu0 0.0
    %445 = vmatpush2.msra.mxu0 0.0
    %446 = vmatprep.subr.mxu0 0.0
    %447 = vmatpush2.msra.mxu0 0.0
    %448 = vmatprep.subr.mxu0 0.0
    %449 = vmatpush2.msra.mxu0 0.0
    %450 = vmatprep.subr.mxu0 0.0
    %451 = vmatpush2.msra.mxu0 0.0
    %452 = vmatprep.subr.mxu0 0.0
    %453 = vmatpush2.msra.mxu0 0.0
    %454 = vmatprep.subr.mxu0 0.0
    %455 = vmatpush2.msra.mxu0 0.0
    %456 = vmatprep.mubr.f32.mxu0 0.0
    %457 = vmatmul.mubr.f32.gmra.mxu0 %v368
    %v458 = vpop.f32.mrf.mxu0
    %v459 = vadd.f32 %v390, %v458
    %v460 = vpop.f32.mrf.mxu0
    %461 = vdwg.mxu0
    %462 = vst [vmem:[#allocation11] sm:$0xff] %v459
    // Predicated region
    $region58: #{tpu_custom_call.1} parent=1 // pred_check
      _
    $region59: #{tpu_custom_call.1} parent=1 // pred_check_branch
      %464 = sbr.rel (0) target = $region61
    $region60: #{tpu_custom_call.1} parent=1 // pred_region
      %s466 = ssub.s32 128, 128
      %467 = vsyncadd [#allocation4], %s466
      %s469 = sshll.u32 [#allocation11], 4
      %s470 = int_to_ptr.vmem [resolvable:$true] %s469
      %472 = dma.vmem_to_hbm [thread:$0]  %s470, 128, %s9, [#allocation4]
    $region61: #{tpu_custom_call.1} parent=1 // pred_fallthru
      _
    // Predicated region
    $region62: #{tpu_custom_call.1} parent=1 // pred_check
      _
    $region63: #{tpu_custom_call.1} parent=1 // pred_check_branch
      %474 = sbr.rel (0) target = $region65
    $region64: #{tpu_custom_call.1} parent=1 // pred_region
      %475 = dma.done [#allocation4], 128
    $region65: #{tpu_custom_call.1} parent=1 // pred_fallthru
      _
    %476 = vsyncpa [#allocation3], 1
    %477 = vsyncpa [#allocation6], 1
    %478 = vsyncpa [#allocation9], 1
    %479 = vsyncpa [#allocation4], 1

</llo_original>
